<compile_context>
chip_gen: v7x
topology: tpu7x:2x2x1
jax: 0.10.0
libtpu: 0.0.40
codegen_flags: <defaults>
</compile_context>

<pallas_src>
import math

import jax
import jax.numpy as jnp
from jax.experimental import pallas as pl
from jax.experimental.pallas import tpu as pltpu


NEG_INF = -1e30
HP = 128          # hidden padded to a full lane width
ROW_TILE = 8      # destination-row tile (multiple of 8)


def _round_up(x, m):
    return ((x + m - 1) // m) * m


# ----------------------------------------------------------------------------
# Kernels
# ----------------------------------------------------------------------------
def linear_kernel(x_ref, w_ref, b_ref, o_ref):
    """o = x @ w + b   (W_n projection), row-tiled."""
    o_ref[...] = (
        jnp.dot(x_ref[...], w_ref[...], preferred_element_type=jnp.float32)
        + b_ref[...]
    )


def graphconv_kernel(
    hall_ref,   # (NP, HP)  all node features (sources)
    hdst_ref,   # (TI, HP)  destination-row tile of node features
    adj_ref,    # (TI, NP)  int8, adj[dst, src] in {0, 1}
    w1s_ref,    # (HP, HP)  calculate_a first linear, src half
    w1d_ref,    # (HP, HP)  calculate_a first linear, dst half
    b1_ref,     # (1, HP)
    w2_ref,     # (1, HP)   calculate_a second linear (H -> 1)
    b2_ref,     # (1, 1)
    we1_ref,    # (HP, HP)  eps first linear
    be1_ref,    # (1, HP)
    we2c_ref,   # (HP, 1)   eps second linear as a column (H -> 1)
    be2_ref,    # (1, 1)
    o_ref,      # (TI, HP)  output rows
):
    h_all = hall_ref[...]
    h_dst = hdst_ref[...]
    mask = adj_ref[...] != 0                                  # (TI, NP) bool

    # --- apply_edges: a_ij = MLP(cat(h_src_j, h_dst_i)) ----------------------
    # b1 folded into the per-destination term (kept out of the O(N^2 H) add).
    z_src = jnp.dot(h_all, w1s_ref[...],
                    preferred_element_type=jnp.float32)        # (NP, HP)
    z_dst = (jnp.dot(h_dst, w1d_ref[...],
                     preferred_element_type=jnp.float32)
             + b1_ref[...])                                    # (TI, HP)

    # pairwise slab for this destination tile only: (TI, NP, HP), lane-dense.
    s = jnp.maximum(z_dst[:, None, :] + z_src[None, :, :], 0.0)
    a = jnp.sum(s * w2_ref[...][None, :, :], axis=-1) + b2_ref[...]  # (TI, NP)

    # --- edge_softmax over incoming edges of each destination row ------------
    logits = jnp.where(mask, a, jnp.float32(NEG_INF))
    row_max = jnp.max(logits, axis=1, keepdims=True)
    row_max = jnp.where(row_max < -1e29, 0.0, row_max)         # isolated rows
    p = jnp.exp(logits - row_max)                # masked entries underflow -> 0
    denom = jnp.sum(p, axis=1, keepdims=True)
    denom = jnp.where(denom == 0.0, 1.0, denom)
    alpha = p * pl.reciprocal(denom, approx=True)              # (TI, NP)

    # --- update_all(u_mul_e, sum):  hv[i] = sum_j alpha[i,j] * h[j] ----------
    hv = jnp.dot(alpha, h_all, preferred_element_type=jnp.float32)  # (TI, HP)

    # --- eps MLP (H-reduction on the MXU) and residual update ----------------
    e1 = jnp.maximum(
        jnp.dot(h_dst, we1_ref[...], preferred_element_type=jnp.float32)
        + be1_ref[...],
        0.0,
    )
    eps = (jnp.dot(e1, we2c_ref[...], preferred_element_type=jnp.float32)
           + be2_ref[...])                                     # (TI, 1)

    o_ref[...] = (1.0 + eps) * hv + h_dst


# ----------------------------------------------------------------------------
# Wrappers
# ----------------------------------------------------------------------------
def _const_spec(shape):
    return pl.BlockSpec(shape, lambda i: (0,) * len(shape))


def pallas_linear(x, w, b, *, row_tile):
    npad, din = x.shape
    hp = w.shape[1]
    return pl.pallas_call(
        linear_kernel,
        out_shape=jax.ShapeDtypeStruct((npad, hp), jnp.float32),
        grid_spec=pltpu.PrefetchScalarGridSpec(
            num_scalar_prefetch=0,
            grid=(npad // row_tile,),
            in_specs=[
                pl.BlockSpec((row_tile, din), lambda i: (i, 0)),
                _const_spec((din, hp)),
                _const_spec((1, hp)),
            ],
            out_specs=pl.BlockSpec((row_tile, hp), lambda i: (i, 0)),
        ),
        compiler_params=pltpu.CompilerParams(
            dimension_semantics=("parallel",)),
    )(x, w, b)


def pallas_graphconv(h, adj_i8, p, *, row_tile):
    npad, hp = h.shape
    return pl.pallas_call(
        graphconv_kernel,
        out_shape=jax.ShapeDtypeStruct((npad, hp), jnp.float32),
        grid_spec=pltpu.PrefetchScalarGridSpec(
            num_scalar_prefetch=0,
            grid=(npad // row_tile,),
            in_specs=[
                pl.BlockSpec((npad, hp), lambda i: (0, 0)),        # h (all)
                pl.BlockSpec((row_tile, hp), lambda i: (i, 0)),    # h (dst rows)
                pl.BlockSpec((row_tile, npad), lambda i: (i, 0)),  # adj tile
                _const_spec(p["w1s"].shape),
                _const_spec(p["w1d"].shape),
                _const_spec(p["b1"].shape),
                _const_spec(p["w2"].shape),
                _const_spec(p["b2"].shape),
                _const_spec(p["we1"].shape),
                _const_spec(p["be1"].shape),
                _const_spec(p["we2c"].shape),
                _const_spec(p["be2"].shape),
            ],
            out_specs=pl.BlockSpec((row_tile, hp), lambda i: (i, 0)),
        ),
        compiler_params=pltpu.CompilerParams(
            dimension_semantics=("parallel",)),
    )(h, h, adj_i8,
      p["w1s"], p["w1d"], p["b1"], p["w2"], p["b2"],
      p["we1"], p["be1"], p["we2c"], p["be2"])


def _pad2(x, r, c):
    return jnp.pad(x, ((0, r - x.shape[0]), (0, c - x.shape[1])))


def pad_params(params, node_in, hidden, hp):
    """Zero-pad the hidden axis to hp; padded feature columns stay zero
    through every layer, so results in the first `hidden` columns match the
    unpadded model exactly."""
    out = dict(
        wn=_pad2(params["wn"], node_in, hp),
        bn=_pad2(params["bn"], 1, hp),
        layers=[],
    )
    for p in params["layers"]:
        out["layers"].append(dict(
            w1s=_pad2(p["w1s"], hp, hp),
            w1d=_pad2(p["w1d"], hp, hp),
            b1=_pad2(p["b1"], 1, hp),
            w2=_pad2(p["w2"], 1, hp),
            b2=p["b2"],
            we1=_pad2(p["we1"], hp, hp),
            be1=_pad2(p["be1"], 1, hp),
            we2c=_pad2(p["we2"].T, hp, 1),
            be2=p["be2"],
        ))
    return out


def lggat_forward(node_feats, adj, params, *, hidden, hp=HP, row_tile=ROW_TILE):
    """Returns node_feats_list, matching LGGAT.forward (dropout = eval)."""
    assert row_tile % 8 == 0
    n, din = node_feats.shape
    npad = _round_up(n, row_tile)

    x = jnp.pad(node_feats.astype(jnp.float32), ((0, npad - n), (0, 0)))
    adj_p = jnp.pad(adj, ((0, npad - n), (0, npad - n)))
    adj_i8 = (adj_p != 0).astype(jnp.int8)     # int8 adjacency in HBM
    pp = pad_params(params, din, hidden, hp)

    h = pallas_linear(x, pp["wn"], pp["bn"], row_tile=row_tile)
    node_feats_list = [h[:n, :hidden]]
    for layer_p in pp["layers"]:
        h = pallas_graphconv(h, adj_i8, layer_p, row_tile=row_tile)
        node_feats_list.append(h[:n, :hidden])
    return node_feats_list


# ----------------------------------------------------------------------------
# Pure-JAX reference (for verification)
# ----------------------------------------------------------------------------
def ref_graphconv(h, adj, p):
    z_src = h @ p["w1s"]
    z_dst = h @ p["w1d"]
    pre = z_dst[:, None, :] + z_src[None, :, :] + p["b1"][None, :, :]
    s = jnp.maximum(pre, 0.0)
    a = jnp.sum(s * p["w2"][None, :, :], axis=-1) + p["b2"]
    logits = jnp.where(adj > 0, a, NEG_INF)
    row_max = jnp.max(logits, axis=1, keepdims=True)
    row_max = jnp.where(row_max < -1e29, 0.0, row_max)
    prob = jnp.exp(logits - row_max) * adj
    denom = jnp.sum(prob, axis=1, keepdims=True)
    denom = jnp.where(denom == 0.0, 1.0, denom)
    alpha = prob / denom
    hv = alpha @ h
    e1 = jnp.maximum(h @ p["we1"] + p["be1"], 0.0)
    eps = jnp.sum(e1 * p["we2"], axis=-1, keepdims=True) + p["be2"]
    return (1.0 + eps) * hv + h


def ref_forward(node_feats, adj, params):
    h = node_feats @ params["wn"] + params["bn"]
    outs = [h]
    for layer_p in params["layers"]:
        h = ref_graphconv(h, adj, layer_p)
        outs.append(h)
    return outs


# ----------------------------------------------------------------------------
# Deterministic parameter init (torch.nn.Linear-style uniform bounds)
# ----------------------------------------------------------------------------
def init_linear(key, fan_in, fan_out):
    kw, kb = jax.random.split(key)
    bound = 1.0 / math.sqrt(fan_in)
    w = jax.random.uniform(kw, (fan_in, fan_out), jnp.float32, -bound, bound)
    b = jax.random.uniform(kb, (1, fan_out), jnp.float32, -bound, bound)
    return w, b


def init_params(key, node_in, hidden, num_layers):
    keys = jax.random.split(key, 1 + num_layers)
    wn, bn = init_linear(keys[0], node_in, hidden)
    layers = []
    for li in range(num_layers):
        k = jax.random.split(keys[1 + li], 4)
        # calculate_a: Linear(2H, H) -> ReLU -> Linear(H, 1)   (pretrain=False)
        w1, b1 = init_linear(k[0], 2 * hidden, hidden)
        w2, b2 = init_linear(k[1], hidden, 1)
        # eps: Linear(H, H) -> ReLU -> Linear(H, 1)
        we1, be1 = init_linear(k[2], hidden, hidden)
        we2, be2 = init_linear(k[3], hidden, 1)
        layers.append(
            dict(
                w1s=w1[:hidden],            # src half of (2H, H)
                w1d=w1[hidden:],            # dst half
                b1=b1,
                w2=w2.T,                    # (1, H)
                b2=b2,                      # (1, 1)
                we1=we1,
                be1=be1,
                we2=we2.T,                  # (1, H)
                be2=be2,                    # (1, 1)
            )
        )
    return dict(wn=wn, bn=bn, layers=layers)


# ----------------------------------------------------------------------------
# Main
# ----------------------------------------------------------------------------
if __name__ == "__main__":
    config = dict(
        node_in_feats=16,
        graph_hidden_feats=32,
        num_step_message_passing=2,
        pretrain=False,
    )
    N = 8  # number of graph nodes

    key = jax.random.PRNGKey(0)
    k_feat, k_param = jax.random.split(key)

    node_feats = jax.random.normal(
        k_feat, (N, config["node_in_feats"]), jnp.float32
    )

    # Small directed graph: ring + a few extra edges (every node has in-edges).
    src = [0, 1, 2, 3, 4, 5, 6, 7, 0, 2, 5, 7, 1, 4]
    dst = [1, 2, 3, 4, 5, 6, 7, 0, 4, 6, 1, 3, 7, 0]
    adj = jnp.zeros((N, N), jnp.float32).at[jnp.array(dst), jnp.array(src)].set(1.0)

    params = init_params(
        k_param,
        config["node_in_feats"],
        config["graph_hidden_feats"],
        config["num_step_message_passing"],
    )

    outs = lggat_forward(
        node_feats, adj, params, hidden=config["graph_hidden_feats"]
    )
    outs = [jax.block_until_ready(o) for o in outs]

    refs = ref_forward(node_feats, adj, params)
    for o, r in zip(outs, refs):
        assert o.shape == r.shape
        # tolerance loosened slightly vs exact division because the softmax
        # denominator uses pl.reciprocal(approx=True)
        assert jnp.allclose(o, r, atol=5e-3, rtol=5e-3), "mismatch vs reference"

    print("KERNEL_OK")
</pallas_src>

<mosaic_0001>
module attributes {stable_mosaic.version = 11 : i64} {
  func.func @linear_kernel(%arg0: i32, %arg1: memref<8x16xf32, #tpu.memory_space<vmem>>, %arg2: memref<16x128xf32, #tpu.memory_space<vmem>>, %arg3: memref<1x128xf32, #tpu.memory_space<vmem>>, %arg4: memref<8x128xf32, #tpu.memory_space<vmem>>) attributes {dimension_semantics = [#tpu.dimension_semantics<parallel>], iteration_bounds = array<i64: 1>, scalar_prefetch = 0 : i64, scratch_operands = 0 : i64, tpu.core_type = #tpu.core_type<tc>, window_params = [{transform_indices = @transform_0, window_bounds = array<i64: 8, 16>}, {pipeline_mode = #tpu.pipeline_mode<synchronous>, transform_indices = @transform_1, window_bounds = array<i64: 16, 128>}, {pipeline_mode = #tpu.pipeline_mode<synchronous>, transform_indices = @transform_2, window_bounds = array<i64: 1, 128>}, {transform_indices = @transform_3, window_bounds = array<i64: 8, 128>}]} {
    %c0 = arith.constant 0 : index
    %c0_0 = arith.constant 0 : index
    %0 = vector.load %arg1[%c0, %c0_0] : memref<8x16xf32, #tpu.memory_space<vmem>>, vector<8x16xf32>
    %c0_1 = arith.constant 0 : index
    %c0_2 = arith.constant 0 : index
    %1 = vector.load %arg2[%c0_1, %c0_2] : memref<16x128xf32, #tpu.memory_space<vmem>>, vector<16x128xf32>
    %cst = arith.constant dense<0.000000e+00> : vector<8x128xf32>
    %2 = tpu.matmul %0, %1, %cst {dimension_numbers = #tpu.dot_dimension_numbers<[1], [0], [0], [1], [0, 0, 1, 1], [], []>} : vector<8x16xf32>, vector<16x128xf32>, vector<8x128xf32> -> vector<8x128xf32>
    %c0_3 = arith.constant 0 : index
    %c0_4 = arith.constant 0 : index
    %3 = vector.load %arg3[%c0_3, %c0_4] : memref<1x128xf32, #tpu.memory_space<vmem>>, vector<1x128xf32>
    %4 = vector.broadcast %3 : vector<1x128xf32> to vector<8x128xf32>
    %5 = arith.addf %2, %4 : vector<8x128xf32>
    %c0_5 = arith.constant 0 : index
    %c0_6 = arith.constant 0 : index
    %6 = vector.load %arg4[%c0_5, %c0_6] : memref<8x128xf32, #tpu.memory_space<vmem>>, vector<8x128xf32>
    tpu.vector_store %arg4[%c0_5, %c0_6], %5 {strides = array<i32>} : memref<8x128xf32, #tpu.memory_space<vmem>>, vector<8x128xf32>,
    return
  }
  func.func @transform_0(%arg0: i32) -> (i32, i32) {
    %c0_i32 = arith.constant 0 : i32
    %c0_i32_0 = arith.constant 0 : i32
    return %arg0, %c0_i32 : i32, i32
  }
  func.func @transform_1(%arg0: i32) -> (i32, i32) {
    %c0_i32 = arith.constant 0 : i32
    %c0_i32_0 = arith.constant 0 : i32
    %c0_i32_1 = arith.constant 0 : i32
    return %c0_i32, %c0_i32_0 : i32, i32
  }
  func.func @transform_2(%arg0: i32) -> (i32, i32) {
    %c0_i32 = arith.constant 0 : i32
    %c0_i32_0 = arith.constant 0 : i32
    %c0_i32_1 = arith.constant 0 : i32
    return %c0_i32, %c0_i32_0 : i32, i32
  }
  func.func @transform_3(%arg0: i32) -> (i32, i32) {
    %c0_i32 = arith.constant 0 : i32
    %c0_i32_0 = arith.constant 0 : i32
    return %arg0, %c0_i32 : i32, i32
  }
}

</mosaic_0001>

<llo_original>
// kernel: tpu_custom_call.1
$region0: #{tpu_custom_call.1}
  #allocation0 [shape = 'u32[]', space=smem, size = 0x4, offset = 0x4, fixed_abs, tag = 'smem constant byte address 0x4 - core index']
  #allocation1 [shape = 'u32[144,128]{1,0:T(1,128)}', space=vmem, size = 0x12000, scoped, tag = 'internal scratch']
  %s0 = inlined_call_operand.hbm [shape: f32[8,16], index: 0, kind: input, shape index: {}]
  %s1 = inlined_call_operand.hbm [shape: f32[16,128], index: 1, kind: input, shape index: {}]
  %s2 = inlined_call_operand.vmem [shape: f32[1,128], index: 2, kind: input, shape index: {}]
  %s3 = inlined_call_operand.hbm [shape: f32[8,128], index: 3, kind: output, shape index: {}]
  %s4 = sld [smem:[#allocation0]]
  $region30: #{tpu_custom_call.1} parent=0
    _
  %s6 = ssub.s32 1, %s4
  %s7 = scalar_select 0, %s6, %s4
  $region1: #{tpu_custom_call.1} parent=0
    #allocation2 [shape = 'u8[4096]{0}', space=vmem, size = 0x1000, scoped, tag = 'input window, operand 0, single buffered']
    #allocation3 [shape = 's32[1]{0}', space=sflag, size = 0x4, scoped, tag = 'scoped memory for tpu_custom_call.1']
    #allocation4 [shape = 's32[1]{0}', space=sflag, size = 0x4, scoped, tag = 'scoped memory for tpu_custom_call.1']
    #allocation5 [shape = 'u8[8192]{0}', space=vmem, size = 0x2000, scoped, tag = 'input window, operand 1, single buffered']
    #allocation6 [shape = 's32[1]{0}', space=sflag, size = 0x4, scoped, tag = 'scoped memory for tpu_custom_call.1']
    #allocation7 [shape = 'u8[4096]{0}', space=vmem, size = 0x1000, scoped, tag = 'output window, operand 0, single buffered']
    %8 = vsyncpa [#allocation3], 0
    %9 = vsyncpa [#allocation6], 0
    %10 = vsyncpa [#allocation4], 0
    // Predicated region
    $region2: #{tpu_custom_call.1} parent=1 // pred_check
      _
    $region3: #{tpu_custom_call.1} parent=1 // pred_check_branch
      %12 = sbr.rel (0) target = $region5
    $region4: #{tpu_custom_call.1} parent=1 // pred_region
      %s14 = ssub.s32 128, 128
      %15 = vsyncadd [#allocation3], %s14
      %s17 = sshll.u32 [#allocation2], 4
      %s18 = int_to_ptr.vmem [resolvable:$true] %s17
      %20 = dma.hbm_to_vmem [thread:$0]  %s0, 128, %s18, [#allocation3]
    $region5: #{tpu_custom_call.1} parent=1 // pred_fallthru
      _
    // Predicated region
    $region6: #{tpu_custom_call.1} parent=1 // pred_check
      _
    $region7: #{tpu_custom_call.1} parent=1 // pred_check_branch
      %22 = sbr.rel (0) target = $region9
    $region8: #{tpu_custom_call.1} parent=1 // pred_region
      %s24 = ssub.s32 256, 256
      %25 = vsyncadd [#allocation6], %s24
      %s26 = sshll.u32 [#allocation5], 4
      %s27 = int_to_ptr.vmem [resolvable:$true] %s26
      %32 = dma.hbm_to_vmem [thread:$0]  %s1, 256, %s27, [#allocation6], 128, 128, 8
    $region9: #{tpu_custom_call.1} parent=1 // pred_fallthru
      _
    // Predicated region
    $region10: #{tpu_custom_call.1} parent=1 // pred_check
      _
    $region11: #{tpu_custom_call.1} parent=1 // pred_check_branch
      %34 = sbr.rel (0) target = $region13
    $region12: #{tpu_custom_call.1} parent=1 // pred_region
      _
    $region13: #{tpu_custom_call.1} parent=1 // pred_fallthru
      _
    // Predicated region
    $region14: #{tpu_custom_call.1} parent=1 // pred_check
      _
    $region15: #{tpu_custom_call.1} parent=1 // pred_check_branch
      %36 = sbr.rel (0) target = $region17
    $region16: #{tpu_custom_call.1} parent=1 // pred_region
      %37 = dma.done [#allocation3], 128
    $region17: #{tpu_custom_call.1} parent=1 // pred_fallthru
      _
    // Predicated region
    $region18: #{tpu_custom_call.1} parent=1 // pred_check
      _
    $region19: #{tpu_custom_call.1} parent=1 // pred_check_branch
      %39 = sbr.rel (0) target = $region21
    $region20: #{tpu_custom_call.1} parent=1 // pred_region
      %40 = dma.done [#allocation6], 256
    $region21: #{tpu_custom_call.1} parent=1 // pred_fallthru
      _
    %v41 = vld [vmem:[#allocation2] sm:$0xff]
    %v42 = vld [vmem:[#allocation5] sm:$0xff]
    %v43 = vld [vmem:[#allocation5 + $0x8] sm:$0xff]
    %v44 = vld [vmem:[%s2] sm:$0x1]
    %v46 = vlaneseq
    %v47 = vshrl.u32 %v46, 7
    %v48 = vsub.s32 0, %v47
    %v49 = vrot.slane %v44, %v48
    %vm51 = vcmask 130048
    %v53 = vsel %vm51, %v41, 0
    %55 = vmatprep.subr.mxu0 0.0
    %56 = vmatpush1.msra.mxu0 %v42
    %57 = vmatprep.subr.mxu0 0.0
    %58 = vmatpush1.msra.mxu0 %v43
    %59 = vmatprep.subr.mxu0 0.0
    %60 = vmatpush1.msra.mxu0 0.0
    %61 = vmatprep.subr.mxu0 0.0
    %62 = vmatpush1.msra.mxu0 0.0
    %63 = vmatprep.subr.mxu0 0.0
    %64 = vmatpush1.msra.mxu0 0.0
    %65 = vmatprep.subr.mxu0 0.0
    %66 = vmatpush1.msra.mxu0 0.0
    %67 = vmatprep.subr.mxu0 0.0
    %68 = vmatpush1.msra.mxu0 0.0
    %69 = vmatprep.subr.mxu0 0.0
    %70 = vmatpush1.msra.mxu0 0.0
    %71 = vmatprep.subr.mxu0 0.0
    %72 = vmatpush1.msra.mxu0 0.0
    %73 = vmatprep.subr.mxu0 0.0
    %74 = vmatpush1.msra.mxu0 0.0
    %75 = vmatprep.subr.mxu0 0.0
    %76 = vmatpush1.msra.mxu0 0.0
    %77 = vmatprep.subr.mxu0 0.0
    %78 = vmatpush1.msra.mxu0 0.0
    %79 = vmatprep.subr.mxu0 0.0
    %80 = vmatpush1.msra.mxu0 0.0
    %81 = vmatprep.subr.mxu0 0.0
    %82 = vmatpush1.msra.mxu0 0.0
    %83 = vmatprep.subr.mxu0 0.0
    %84 = vmatpush1.msra.mxu0 0.0
    %85 = vmatprep.subr.mxu0 0.0
    %86 = vmatpush1.msra.mxu0 0.0
    %87 = vmatprep.subr.mxu0 0.0
    %88 = vmatpush1.msra.mxu0 0.0
    %89 = vmatprep.subr.mxu0 0.0
    %90 = vmatpush1.msra.mxu0 0.0
    %91 = vmatprep.subr.mxu0 0.0
    %92 = vmatpush1.msra.mxu0 0.0
    %93 = vmatprep.subr.mxu0 0.0
    %94 = vmatpush1.msra.mxu0 0.0
    %95 = vmatprep.subr.mxu0 0.0
    %96 = vmatpush1.msra.mxu0 0.0
    %97 = vmatprep.subr.mxu0 0.0
    %98 = vmatpush1.msra.mxu0 0.0
    %99 = vmatprep.subr.mxu0 0.0
    %100 = vmatpush1.msra.mxu0 0.0
    %101 = vmatprep.subr.mxu0 0.0
    %102 = vmatpush1.msra.mxu0 0.0
    %103 = vmatprep.subr.mxu0 0.0
    %104 = vmatpush1.msra.mxu0 0.0
    %105 = vmatprep.subr.mxu0 0.0
    %106 = vmatpush1.msra.mxu0 0.0
    %107 = vmatprep.subr.mxu0 0.0
    %108 = vmatpush1.msra.mxu0 0.0
    %109 = vmatprep.subr.mxu0 0.0
    %110 = vmatpush1.msra.mxu0 0.0
    %111 = vmatprep.subr.mxu0 0.0
    %112 = vmatpush1.msra.mxu0 0.0
    %113 = vmatprep.subr.mxu0 0.0
    %114 = vmatpush1.msra.mxu0 0.0
    %115 = vmatprep.subr.mxu0 0.0
    %116 = vmatpush1.msra.mxu0 0.0
    %117 = vmatprep.subr.mxu0 0.0
    %118 = vmatpush1.msra.mxu0 0.0
    %119 = vmatprep.mubr.f32.mxu0 0.0
    %120 = vmatmul.mubr.f32.gmra.mrb[0].mxu0 %v53
    %v121 = vpop.f32.mrb[0].mxu0
    %v122 = vadd.f32 %v49, %v121
    %v123 = vpop.f32.mrb[0].mxu0
    %124 = vdwg.mxu0
    %125 = vst [vmem:[#allocation7] sm:$0xff] %v122
    // Predicated region
    $region22: #{tpu_custom_call.1} parent=1 // pred_check
      _
    $region23: #{tpu_custom_call.1} parent=1 // pred_check_branch
      %127 = sbr.rel (0) target = $region25
    $region24: #{tpu_custom_call.1} parent=1 // pred_region
      %s129 = ssub.s32 128, 128
      %130 = vsyncadd [#allocation4], %s129
      %s132 = sshll.u32 [#allocation7], 4
      %s133 = int_to_ptr.vmem [resolvable:$true] %s132
      %135 = dma.vmem_to_hbm [thread:$0]  %s133, 128, %s3, [#allocation4]
    $region25: #{tpu_custom_call.1} parent=1 // pred_fallthru
      _
    // Predicated region
    $region26: #{tpu_custom_call.1} parent=1 // pred_check
      _
    $region27: #{tpu_custom_call.1} parent=1 // pred_check_branch
      %137 = sbr.rel (0) target = $region29
    $region28: #{tpu_custom_call.1} parent=1 // pred_region
      %138 = dma.done [#allocation4], 128
    $region29: #{tpu_custom_call.1} parent=1 // pred_fallthru
      _
    %139 = vsyncpa [#allocation3], 1
    %140 = vsyncpa [#allocation6], 1
    %141 = vsyncpa [#allocation4], 1

</llo_original>
